<compile_context>
chip_gen: v7x
topology: tpu7x:2x2x1
jax: 0.10.0
libtpu: 0.0.40
codegen_flags: <defaults>
</compile_context>

<pallas_src>
import functools

import jax
import jax.numpy as jnp
from jax.experimental import pallas as pl
from jax.experimental.pallas import tpu as pltpu


def _fused_conv_unshuffle_kernel(x_ref, w_ref, o_ref, *, H2, W2, Cin):
    """Processes one batch element.

    x_ref: (1, 2*(H2+1), 2*(W2+1), Cin)  parity-grouped, zero-padded NHWC input:
           x_ref[0, q*(H2+1)+i, p*(W2+1)+j, c] == xpad[2*i+q, 2*j+p, c]
    w_ref: (16*Cin, 4*Cout)              folded conv+unshuffle weight
    o_ref: (1, H2*W2, 4*Cout)            unshuffled output, channel = cout*4+dy*2+dx
    """
    # Single weight load; the weight block is VMEM-resident across the whole grid
    # (constant index_map), so this is read once per grid step from VMEM only.
    w = w_ref[...]

    # im2col of the stride-2 4x4 window: 16 contiguous (H2, W2, Cin) slices
    # concatenated along the channel (lane) axis -> (H2, W2, 16*Cin).
    parts = []
    for ph in range(4):
        q, i0 = ph % 2, ph // 2
        r0 = q * (H2 + 1) + i0
        for pw in range(4):
            p, j0 = pw % 2, pw // 2
            c0 = p * (W2 + 1) + j0
            parts.append(x_ref[0, r0:r0 + H2, c0:c0 + W2, :])
    patches = jnp.concatenate(parts, axis=-1).reshape(H2 * W2, 16 * Cin)

    # One MXU matmul, f32 accumulation.
    acc = jnp.dot(patches, w, preferred_element_type=jnp.float32)
    o_ref[...] = acc.reshape(o_ref.shape).astype(o_ref.dtype)


def pruned_downsample(x_nchw, weight_oihw):
    """Forward of PrunedDownsample: conv3x3(pad=1, no bias) + PixelUnshuffle(2).

    x_nchw:      (N, Cin, H, W)
    weight_oihw: (Cout, Cin, 3, 3)   (PyTorch nn.Conv2d layout)
    returns:     (N, 4*Cout, H//2, W//2)   (NCHW, matching the PyTorch module)
    """
    N, Cin, H, W = x_nchw.shape
    Cout = weight_oihw.shape[0]
    assert H % 2 == 0 and W % 2 == 0, "PixelUnshuffle(2) needs even H and W"
    H2, W2 = H // 2, W // 2
    C4 = 4 * Cout

    # ---- fold conv weights + pixel-unshuffle into one (16*Cin, 4*Cout) matrix ----
    # W4[ph, pw, cin, cout*4 + dy*2 + dx] = w[cout, cin, ph-dy, pw-dx] (0 outside 3x3)
    w_t = jnp.transpose(weight_oihw, (2, 3, 1, 0))            # (kh, kw, cin, cout)
    w4 = jnp.zeros((4, 4, Cin, C4), dtype=weight_oihw.dtype)
    for dy in range(2):
        for dx in range(2):
            w4 = w4.at[dy:dy + 3, dx:dx + 3, :, dy * 2 + dx::4].set(w_t)
    w4 = w4.reshape(16 * Cin, C4)                              # K ordered (ph, pw, cin)

    # ---- input prep: NCHW -> zero-padded NHWC, rows/cols regrouped by parity ----
    # xg[n, q*(H2+1)+i, p*(W2+1)+j, c] = xpad[n, 2i+q, 2j+p, c]
    # (one small fused XLA layout pass; lets the kernel use only contiguous slices)
    x_nhwc = jnp.transpose(x_nchw, (0, 2, 3, 1))
    xp = jnp.pad(x_nhwc, ((0, 0), (1, 1), (1, 1), (0, 0)))
    xg = xp.reshape(N, H2 + 1, 2, W2 + 1, 2, Cin)
    xg = jnp.transpose(xg, (0, 2, 1, 4, 3, 5)).reshape(
        N, 2 * (H2 + 1), 2 * (W2 + 1), Cin)

    kernel = functools.partial(_fused_conv_unshuffle_kernel, H2=H2, W2=W2, Cin=Cin)

    out_flat = pl.pallas_call(
        kernel,
        out_shape=jax.ShapeDtypeStruct((N, H2 * W2, C4), x_nchw.dtype),
        grid_spec=pltpu.PrefetchScalarGridSpec(
            num_scalar_prefetch=0,
            grid=(N,),
            in_specs=[
                pl.BlockSpec((1, 2 * (H2 + 1), 2 * (W2 + 1), Cin),
                             lambda b: (b, 0, 0, 0)),
                pl.BlockSpec((16 * Cin, C4), lambda b: (0, 0)),
            ],
            out_specs=pl.BlockSpec((1, H2 * W2, C4), lambda b: (b, 0, 0)),
        ),
        compiler_params=pltpu.CompilerParams(
            dimension_semantics=("parallel",),       # batch shards across TCs (v7x)
            vmem_limit_bytes=64 * 1024 * 1024,       # room to double-buffer big tiles
        ),
    )(xg, w4)

    # (N, H2*W2, 4*Cout) -> NCHW (N, 4*Cout, H2, W2): the single output-side pass.
    return jnp.transpose(out_flat.reshape(N, H2, W2, C4), (0, 3, 1, 2))


def _pixel_unshuffle_ref(x_nchw, r=2):
    """torch.nn.PixelUnshuffle(r) reference: (N,C,H,W) -> (N,C*r*r,H/r,W/r)."""
    N, C, H, W = x_nchw.shape
    x = x_nchw.reshape(N, C, H // r, r, W // r, r)
    x = jnp.transpose(x, (0, 1, 3, 5, 2, 4))
    return x.reshape(N, C * r * r, H // r, W // r)


if __name__ == "__main__":
    key = jax.random.PRNGKey(0)
    k_x, k_w = jax.random.split(key)

    N, Cin, H, W = 2, 4, 16, 16
    Cout = 8

    x = jax.random.normal(k_x, (N, Cin, H, W), dtype=jnp.float32)
    # Deterministic synthetic weights (shape matches nn.Conv2d(Cin, Cout, 3, bias=False)).
    weight = jax.random.normal(k_w, (Cout, Cin, 3, 3), dtype=jnp.float32) * 0.1

    out = jax.block_until_ready(pruned_downsample(x, weight))

    # Sanity-check against XLA's conv + reference unshuffle.
    ref_conv = jax.lax.conv_general_dilated(
        x, weight, window_strides=(1, 1), padding=((1, 1), (1, 1)),
        dimension_numbers=("NCHW", "OIHW", "NCHW"),
    )
    ref = _pixel_unshuffle_ref(ref_conv, r=2)
    assert out.shape == (N, Cout * 4, H // 2, W // 2)
    assert jnp.allclose(out, ref, atol=1e-4, rtol=1e-4)

    print("KERNEL_OK")
</pallas_src>

<mosaic_0001>
module attributes {stable_mosaic.version = 11 : i64} {
  func.func @_fused_conv_unshuffle_kernel(%arg0: i32, %arg1: memref<1x18x18x4xf32, #tpu.memory_space<vmem>>, %arg2: memref<64x32xf32, #tpu.memory_space<vmem>>, %arg3: memref<1x64x32xf32, #tpu.memory_space<vmem>>) attributes {dimension_semantics = [#tpu.dimension_semantics<parallel>], iteration_bounds = array<i64: 2>, scalar_prefetch = 0 : i64, scratch_operands = 0 : i64, tpu.core_type = #tpu.core_type<tc>, window_params = [{transform_indices = @transform_0, window_bounds = array<i64: 1, 18, 18, 4>}, {pipeline_mode = #tpu.pipeline_mode<synchronous>, transform_indices = @transform_1, window_bounds = array<i64: 64, 32>}, {transform_indices = @transform_2, window_bounds = array<i64: 1, 64, 32>}]} {
    %c0 = arith.constant 0 : index
    %c0_0 = arith.constant 0 : index
    %0 = vector.load %arg2[%c0, %c0_0] : memref<64x32xf32, #tpu.memory_space<vmem>>, vector<64x32xf32>
    %c0_1 = arith.constant 0 : index
    %c0_2 = arith.constant 0 : index
    %c0_3 = arith.constant 0 : index
    %c0_4 = arith.constant 0 : index
    %1 = vector.load %arg1[%c0_1, %c0_2, %c0_3, %c0_4] : memref<1x18x18x4xf32, #tpu.memory_space<vmem>>, vector<1x8x8x4xf32>
    %2 = vector.shape_cast %1 : vector<1x8x8x4xf32> to vector<8x8x4xf32>
    %c0_5 = arith.constant 0 : index
    %c0_6 = arith.constant 0 : index
    %c9 = arith.constant 9 : index
    %c0_7 = arith.constant 0 : index
    %3 = vector.load %arg1[%c0_5, %c0_6, %c9, %c0_7] : memref<1x18x18x4xf32, #tpu.memory_space<vmem>>, vector<1x8x8x4xf32>
    %4 = vector.shape_cast %3 : vector<1x8x8x4xf32> to vector<8x8x4xf32>
    %c0_8 = arith.constant 0 : index
    %c0_9 = arith.constant 0 : index
    %c1 = arith.constant 1 : index
    %c0_10 = arith.constant 0 : index
    %5 = vector.load %arg1[%c0_8, %c0_9, %c1, %c0_10] : memref<1x18x18x4xf32, #tpu.memory_space<vmem>>, vector<1x8x8x4xf32>
    %6 = vector.shape_cast %5 : vector<1x8x8x4xf32> to vector<8x8x4xf32>
    %c0_11 = arith.constant 0 : index
    %c0_12 = arith.constant 0 : index
    %c10 = arith.constant 10 : index
    %c0_13 = arith.constant 0 : index
    %7 = vector.load %arg1[%c0_11, %c0_12, %c10, %c0_13] : memref<1x18x18x4xf32, #tpu.memory_space<vmem>>, vector<1x8x8x4xf32>
    %8 = vector.shape_cast %7 : vector<1x8x8x4xf32> to vector<8x8x4xf32>
    %c0_14 = arith.constant 0 : index
    %c9_15 = arith.constant 9 : index
    %c0_16 = arith.constant 0 : index
    %c0_17 = arith.constant 0 : index
    %9 = vector.load %arg1[%c0_14, %c9_15, %c0_16, %c0_17] : memref<1x18x18x4xf32, #tpu.memory_space<vmem>>, vector<1x8x8x4xf32>
    %10 = vector.shape_cast %9 : vector<1x8x8x4xf32> to vector<8x8x4xf32>
    %c0_18 = arith.constant 0 : index
    %c9_19 = arith.constant 9 : index
    %c9_20 = arith.constant 9 : index
    %c0_21 = arith.constant 0 : index
    %11 = vector.load %arg1[%c0_18, %c9_19, %c9_20, %c0_21] : memref<1x18x18x4xf32, #tpu.memory_space<vmem>>, vector<1x8x8x4xf32>
    %12 = vector.shape_cast %11 : vector<1x8x8x4xf32> to vector<8x8x4xf32>
    %c0_22 = arith.constant 0 : index
    %c9_23 = arith.constant 9 : index
    %c1_24 = arith.constant 1 : index
    %c0_25 = arith.constant 0 : index
    %13 = vector.load %arg1[%c0_22, %c9_23, %c1_24, %c0_25] : memref<1x18x18x4xf32, #tpu.memory_space<vmem>>, vector<1x8x8x4xf32>
    %14 = vector.shape_cast %13 : vector<1x8x8x4xf32> to vector<8x8x4xf32>
    %c0_26 = arith.constant 0 : index
    %c9_27 = arith.constant 9 : index
    %c10_28 = arith.constant 10 : index
    %c0_29 = arith.constant 0 : index
    %15 = vector.load %arg1[%c0_26, %c9_27, %c10_28, %c0_29] : memref<1x18x18x4xf32, #tpu.memory_space<vmem>>, vector<1x8x8x4xf32>
    %16 = vector.shape_cast %15 : vector<1x8x8x4xf32> to vector<8x8x4xf32>
    %c0_30 = arith.constant 0 : index
    %c1_31 = arith.constant 1 : index
    %c0_32 = arith.constant 0 : index
    %c0_33 = arith.constant 0 : index
    %17 = vector.load %arg1[%c0_30, %c1_31, %c0_32, %c0_33] : memref<1x18x18x4xf32, #tpu.memory_space<vmem>>, vector<1x8x8x4xf32>
    %18 = vector.shape_cast %17 : vector<1x8x8x4xf32> to vector<8x8x4xf32>
    %c0_34 = arith.constant 0 : index
    %c1_35 = arith.constant 1 : index
    %c9_36 = arith.constant 9 : index
    %c0_37 = arith.constant 0 : index
    %19 = vector.load %arg1[%c0_34, %c1_35, %c9_36, %c0_37] : memref<1x18x18x4xf32, #tpu.memory_space<vmem>>, vector<1x8x8x4xf32>
    %20 = vector.shape_cast %19 : vector<1x8x8x4xf32> to vector<8x8x4xf32>
    %c0_38 = arith.constant 0 : index
    %c1_39 = arith.constant 1 : index
    %c1_40 = arith.constant 1 : index
    %c0_41 = arith.constant 0 : index
    %21 = vector.load %arg1[%c0_38, %c1_39, %c1_40, %c0_41] : memref<1x18x18x4xf32, #tpu.memory_space<vmem>>, vector<1x8x8x4xf32>
    %22 = vector.shape_cast %21 : vector<1x8x8x4xf32> to vector<8x8x4xf32>
    %c0_42 = arith.constant 0 : index
    %c1_43 = arith.constant 1 : index
    %c10_44 = arith.constant 10 : index
    %c0_45 = arith.constant 0 : index
    %23 = vector.load %arg1[%c0_42, %c1_43, %c10_44, %c0_45] : memref<1x18x18x4xf32, #tpu.memory_space<vmem>>, vector<1x8x8x4xf32>
    %24 = vector.shape_cast %23 : vector<1x8x8x4xf32> to vector<8x8x4xf32>
    %c0_46 = arith.constant 0 : index
    %c10_47 = arith.constant 10 : index
    %c0_48 = arith.constant 0 : index
    %c0_49 = arith.constant 0 : index
    %25 = vector.load %arg1[%c0_46, %c10_47, %c0_48, %c0_49] : memref<1x18x18x4xf32, #tpu.memory_space<vmem>>, vector<1x8x8x4xf32>
    %26 = vector.shape_cast %25 : vector<1x8x8x4xf32> to vector<8x8x4xf32>
    %c0_50 = arith.constant 0 : index
    %c10_51 = arith.constant 10 : index
    %c9_52 = arith.constant 9 : index
    %c0_53 = arith.constant 0 : index
    %27 = vector.load %arg1[%c0_50, %c10_51, %c9_52, %c0_53] : memref<1x18x18x4xf32, #tpu.memory_space<vmem>>, vector<1x8x8x4xf32>
    %28 = vector.shape_cast %27 : vector<1x8x8x4xf32> to vector<8x8x4xf32>
    %c0_54 = arith.constant 0 : index
    %c10_55 = arith.constant 10 : index
    %c1_56 = arith.constant 1 : index
    %c0_57 = arith.constant 0 : index
    %29 = vector.load %arg1[%c0_54, %c10_55, %c1_56, %c0_57] : memref<1x18x18x4xf32, #tpu.memory_space<vmem>>, vector<1x8x8x4xf32>
    %30 = vector.shape_cast %29 : vector<1x8x8x4xf32> to vector<8x8x4xf32>
    %c0_58 = arith.constant 0 : index
    %c10_59 = arith.constant 10 : index
    %c10_60 = arith.constant 10 : index
    %c0_61 = arith.constant 0 : index
    %31 = vector.load %arg1[%c0_58, %c10_59, %c10_60, %c0_61] : memref<1x18x18x4xf32, #tpu.memory_space<vmem>>, vector<1x8x8x4xf32>
    %32 = vector.shape_cast %31 : vector<1x8x8x4xf32> to vector<8x8x4xf32>
    %33 = tpu.concatenate %2, %4, %6, %8, %10, %12, %14, %16, %18, %20, %22, %24, %26, %28, %30, %32 in 2 : vector<8x8x4xf32>, vector<8x8x4xf32>, vector<8x8x4xf32>, vector<8x8x4xf32>, vector<8x8x4xf32>, vector<8x8x4xf32>, vector<8x8x4xf32>, vector<8x8x4xf32>, vector<8x8x4xf32>, vector<8x8x4xf32>, vector<8x8x4xf32>, vector<8x8x4xf32>, vector<8x8x4xf32>, vector<8x8x4xf32>, vector<8x8x4xf32>, vector<8x8x4xf32> -> vector<8x8x64xf32>
    %34 = vector.shape_cast %33 : vector<8x8x64xf32> to vector<64x64xf32>
    %cst = arith.constant dense<0.000000e+00> : vector<64x32xf32>
    %35 = tpu.matmul %34, %0, %cst {dimension_numbers = #tpu.dot_dimension_numbers<[1], [0], [0], [1], [0, 0, 1, 1], [], []>} : vector<64x64xf32>, vector<64x32xf32>, vector<64x32xf32> -> vector<64x32xf32>
    %36 = vector.shape_cast %35 : vector<64x32xf32> to vector<1x64x32xf32>
    %c0_62 = arith.constant 0 : index
    %c0_63 = arith.constant 0 : index
    %c0_64 = arith.constant 0 : index
    %37 = vector.load %arg3[%c0_62, %c0_63, %c0_64] : memref<1x64x32xf32, #tpu.memory_space<vmem>>, vector<1x64x32xf32>
    tpu.vector_store %arg3[%c0_62, %c0_63, %c0_64], %36 {strides = array<i32>} : memref<1x64x32xf32, #tpu.memory_space<vmem>>, vector<1x64x32xf32>,
    return
  }
  func.func @transform_0(%arg0: i32) -> (i32, i32, i32, i32) {
    %c0_i32 = arith.constant 0 : i32
    %c0_i32_0 = arith.constant 0 : i32
    %c0_i32_1 = arith.constant 0 : i32
    %c0_i32_2 = arith.constant 0 : i32
    return %arg0, %c0_i32, %c0_i32_0, %c0_i32_1 : i32, i32, i32, i32
  }
  func.func @transform_1(%arg0: i32) -> (i32, i32) {
    %c0_i32 = arith.constant 0 : i32
    %c0_i32_0 = arith.constant 0 : i32
    %c0_i32_1 = arith.constant 0 : i32
    return %c0_i32, %c0_i32_0 : i32, i32
  }
  func.func @transform_2(%arg0: i32) -> (i32, i32, i32) {
    %c0_i32 = arith.constant 0 : i32
    %c0_i32_0 = arith.constant 0 : i32
    %c0_i32_1 = arith.constant 0 : i32
    return %arg0, %c0_i32, %c0_i32_0 : i32, i32, i32
  }
}

</mosaic_0001>

<llo_original>
// kernel: tpu_custom_call.1
$region0: #{tpu_custom_call.1}
  #allocation0 [shape = 'u32[]', space=smem, size = 0x4, offset = 0x4, fixed_abs, tag = 'smem constant byte address 0x4 - core index']
  #allocation1 [shape = 'u32[144,128]{1,0:T(1,128)}', space=vmem, size = 0x12000, scoped, tag = 'internal scratch']
  %s0 = inlined_call_operand.hbm [shape: f32[2,18,18,4], index: 0, kind: input, shape index: {}]
  %s1 = inlined_call_operand.hbm [shape: f32[64,32], index: 1, kind: input, shape index: {}]
  %s2 = inlined_call_operand.hbm [shape: f32[2,64,32], index: 2, kind: output, shape index: {}]
  %s3 = sld [smem:[#allocation0]]
  $region49: #{tpu_custom_call.1} parent=0
    _
  %s5 = ssub.s32 1, %s3
  %s6 = scalar_select 0, %s5, %s3
  $region1: #{tpu_custom_call.1} parent=0
    #allocation2 [shape = 'u8[442368]{0}', space=vmem, size = 0x6c000, scoped, tag = 'input window, operand 0']
    #allocation3 [shape = 's32[2]{0}', space=sflag, size = 0x8, scoped, tag = 'scoped memory for tpu_custom_call.1']
    #allocation4 [shape = 's32[2]{0}', space=sflag, size = 0x8, scoped, tag = 'scoped memory for tpu_custom_call.1']
    #allocation5 [shape = 'u8[32768]{0}', space=vmem, size = 0x8000, scoped, tag = 'input window, operand 1, single buffered']
    #allocation6 [shape = 's32[1]{0}', space=sflag, size = 0x4, scoped, tag = 'scoped memory for tpu_custom_call.1']
    #allocation7 [shape = 'u8[65536]{0}', space=vmem, size = 0x10000, scoped, tag = 'output window, operand 0']
    %7 = vsyncpa [#allocation3], 0
    %s8 = scalar_lea.sflag [#allocation3], 1
    %9 = vsyncpa %s8, 0
    %10 = vsyncpa [#allocation6], 0
    %11 = vsyncpa [#allocation4], 0
    %s12 = scalar_lea.sflag [#allocation4], 1
    %13 = vsyncpa %s12, 0
    loop: start=0, step=1, limit=4
    $region2: #{tpu_custom_call.1} parent=1 // loop_pre_header
      _
    $region3: #{tpu_custom_call.1} parent=1 // loop_header
      %s15 = sphi 0, %s19
      %p16 = scmp.ge.s32.totalorder %s15, 4
      %s25 = sphi 0, %s27
      %s28 = sphi 0, %s25
      %s29 = sphi 0, %s28
      %s45 = sphi 0, %s29
      %s49 = sphi 0, %s49
      %s51 = sphi 0, %s49
      %s52 = sphi 0, %s51
      %s66 = sphi 0, %s52
      %s72 = sphi 0, %s74
      %s75 = sphi 0, %s72
      %s76 = sphi 0, %s75
      %s92 = sphi 0, %s76
    $region4: #{tpu_custom_call.1} parent=1 // loop_header_branch
      %18 = sbr.rel (%p16) target = $region8
    $region5: #{tpu_custom_call.1} parent=1 // loop_body
      %s20 = ssub.s32 %s15, 1
      %s21 = ssub.s32 %s15, 2
      %s22 = sadd.s32 %s15, 1
      %s23 = ssub.s32 %s15, %s22
      %p24 = scmp.eq.s32.totalorder %s23, 0
      %s26 = sadd.s32 %s25, 1
      %s27 = scalar_select %p24, %s25, %s26
      %p30 = pneg %p24
      %p31 = scmp.eq.s32.totalorder %s15, 1
      %p32 = por %p30, %p31
      %p33 = scmp.ne.s32.totalorder %s25, %s28
      %p34 = scmp.eq.s32.totalorder %s15, 0
      %p35 = por %p33, %p34
      %p36 = scmp.ne.s32.totalorder %s25, %s28
      %p37 = scmp.eq.s32.totalorder %s20, 1
      %p38 = por %p36, %p37
      %p39 = scmp.ne.s32.totalorder %s28, %s29
      %p40 = scmp.eq.s32.totalorder %s20, 0
      %p41 = por %p39, %p40
      %p42 = scmp.ne.s32.totalorder %s28, %s29
      %p43 = scmp.eq.s32.totalorder %s21, 1
      %p44 = por %p42, %p43
      %p46 = scmp.ne.s32.totalorder %s29, %s45
      %p47 = scmp.eq.s32.totalorder %s21, 0
      %p48 = por %p46, %p47
      %s50 = sadd.s32 %s49, 1
      %p53 = scmp.eq.s32.totalorder %s15, 1
      %p54 = scmp.ne.s32.totalorder %s49, %s51
      %p55 = scmp.eq.s32.totalorder %s15, 0
      %p56 = por %p54, %p55
      %p57 = scmp.ne.s32.totalorder %s49, %s51
      %p58 = scmp.eq.s32.totalorder %s20, 1
      %p59 = por %p57, %p58
      %p60 = scmp.ne.s32.totalorder %s51, %s52
      %p61 = scmp.eq.s32.totalorder %s20, 0
      %p62 = por %p60, %p61
      %p63 = scmp.ne.s32.totalorder %s51, %s52
      %p64 = scmp.eq.s32.totalorder %s21, 1
      %p65 = por %p63, %p64
      %p67 = scmp.ne.s32.totalorder %s52, %s66
      %p68 = scmp.eq.s32.totalorder %s21, 0
      %p69 = por %p67, %p68
      %s70 = ssub.s32 %s15, %s22
      %p71 = scmp.eq.s32.totalorder %s70, 0
      %s73 = sadd.s32 %s72, 1
      %s74 = scalar_select %p71, %s72, %s73
      %p77 = pneg %p71
      %p78 = scmp.eq.s32.totalorder %s15, 1
      %p79 = por %p77, %p78
      %p80 = scmp.ne.s32.totalorder %s72, %s75
      %p81 = scmp.eq.s32.totalorder %s15, 0
      %p82 = por %p80, %p81
      %p83 = scmp.ne.s32.totalorder %s72, %s75
      %p84 = scmp.eq.s32.totalorder %s20, 1
      %p85 = por %p83, %p84
      %p86 = scmp.ne.s32.totalorder %s75, %s76
      %p87 = scmp.eq.s32.totalorder %s20, 0
      %p88 = por %p86, %p87
      %p89 = scmp.ne.s32.totalorder %s75, %s76
      %p90 = scmp.eq.s32.totalorder %s21, 1
      %p91 = por %p89, %p90
      %p93 = scmp.ne.s32.totalorder %s76, %s92
      %p94 = scmp.eq.s32.totalorder %s21, 0
      %p95 = por %p93, %p94
      %p96 = scmp.le.s32.totalorder 1, %s15
      %p97 = scmp.lt.s32.totalorder %s15, 3
      %p98 = pnand %p96, %p97
      %p99 = pneg %p98
      // Predicated region
      $region9: #{tpu_custom_call.1} parent=5 // pred_check
        _
      $region10: #{tpu_custom_call.1} parent=5 // pred_check_branch
        %101 = sbr.rel (%p98) target = $region12
      $region11: #{tpu_custom_call.1} parent=5 // pred_region
        %s102 = ssub.s32 %s15, 1
        // Predicated region
        $region13: #{tpu_custom_call.1} parent=11 // pred_check
          %p103 = pneg %p62
        $region14: #{tpu_custom_call.1} parent=11 // pred_check_branch
          %105 = sbr.rel (%p103) target = $region16
        $region15: #{tpu_custom_call.1} parent=11 // pred_region
          %s107 = ssub.s32 1024, 1024
          %108 = vsyncadd [#allocation6], %s107
          %s109 = sshll.u32 [#allocation5], 4
          %s110 = int_to_ptr.vmem [resolvable:$true] %s109
          %115 = dma.hbm_to_vmem [thread:$0]  %s1, 1024, %s110, [#allocation6], 128, 128, 8
        $region16: #{tpu_custom_call.1} parent=11 // pred_fallthru
          _
      $region12: #{tpu_custom_call.1} parent=5 // pred_fallthru
        _
      %p116 = scmp.lt.s32.totalorder %s15, 2
      // Predicated region
      $region17: #{tpu_custom_call.1} parent=5 // pred_check
        %p117 = pneg %p116
      $region18: #{tpu_custom_call.1} parent=5 // pred_check_branch
        %119 = sbr.rel (%p117) target = $region20
      $region19: #{tpu_custom_call.1} parent=5 // pred_region
        // Predicated region
        $region21: #{tpu_custom_call.1} parent=19 // pred_check
          %p120 = pneg %p35
        $region22: #{tpu_custom_call.1} parent=19 // pred_check_branch
          %122 = sbr.rel (%p120) target = $region24
        $region23: #{tpu_custom_call.1} parent=19 // pred_region
          %s123 = sand.u32 %s25, 1
          %s124 = scalar_lea.sflag [#allocation3], %s123
          %s125 = sand.u32 %s25, 1
          %s126 = smul.addr %s125, 432
          %s127 = scalar_lea.vmem [#allocation2], %s126
          %s129 = ssub.s32 6912, 6912
          %130 = vsyncadd %s124, %s129
          %s131 = smul.addr %s15, 54
          %s132 = smul.addr %s131, 128
          %s133 = scalar_lea.hbm %s0, %s132
          %s134 = sshll.u32 %s127, 4
          %s135 = int_to_ptr.vmem [resolvable:$true] %s134
          %140 = dma.hbm_to_vmem [thread:$0]  %s133, 6912, %s135, %s124, 128, 128, 8
        $region24: #{tpu_custom_call.1} parent=19 // pred_fallthru
          _
      $region20: #{tpu_custom_call.1} parent=5 // pred_fallthru
        _
      %p141 = scmp.le.s32.totalorder 1, %s15
      %p142 = scmp.lt.s32.totalorder %s15, 3
      %p143 = pnand %p141, %p142
      %p144 = pneg %p143
      // Predicated region
      $region25: #{tpu_custom_call.1} parent=5 // pred_check
        _
      $region26: #{tpu_custom_call.1} parent=5 // pred_check_branch
        %146 = sbr.rel (%p143) target = $region28
      $region27: #{tpu_custom_call.1} parent=5 // pred_region
        %s147 = ssub.s32 %s15, 1
        %s148 = sand.u32 %s28, 1
        %s149 = scalar_lea.sflag [#allocation3], %s148
        %s150 = sand.u32 %s28, 1
        %s151 = smul.addr %s150, 432
        %s152 = scalar_lea.vmem [#allocation2], %s151
        // Predicated region
        $region29: #{tpu_custom_call.1} parent=27 // pred_check
          %p153 = pneg %p41
        $region30: #{tpu_custom_call.1} parent=27 // pred_check_branch
          %155 = sbr.rel (%p153) target = $region32
        $region31: #{tpu_custom_call.1} parent=27 // pred_region
          %156 = dma.done %s149, 6912
        $region32: #{tpu_custom_call.1} parent=27 // pred_fallthru
          _
        // Predicated region
        $region33: #{tpu_custom_call.1} parent=27 // pred_check
          %p157 = pneg %p62
        $region34: #{tpu_custom_call.1} parent=27 // pred_check_branch
          %159 = sbr.rel (%p157) target = $region36
        $region35: #{tpu_custom_call.1} parent=27 // pred_region
          %160 = dma.done [#allocation6], 1024
        $region36: #{tpu_custom_call.1} parent=27 // pred_fallthru
          _
        %s161 = sand.u32 %s28, 1
        %s162 = scalar_lea.sflag [#allocation3], %s161
        %s163 = sand.u32 %s28, 1
        %s164 = smul.addr %s163, 432
        %s165 = scalar_lea.vmem [#allocation2], %s164
        %p166 = pneg %p41
        %p167 = pneg %p38
        %p168 = pneg %p62
        %p169 = pneg %p59
        %p170 = pneg %p88
        %p171 = pneg %p85
        %s172 = sand.u32 %s75, 1
        %s173 = scalar_lea.sflag [#allocation4], %s172
        %s174 = sand.u32 %s75, 1
        %s175 = smul.addr %s174, 64
        %s176 = scalar_lea.vmem [#allocation7], %s175
        %v177 = vld [vmem:[#allocation5] sm:$0xff]
        %v178 = vld [vmem:[#allocation5 + $0x8] sm:$0xff]
        %v179 = vld [vmem:[#allocation5 + $0x10] sm:$0xff]
        %v180 = vld [vmem:[#allocation5 + $0x18] sm:$0xff]
        %v181 = vld [vmem:[#allocation5 + $0x20] sm:$0xff]
        %v182 = vld [vmem:[#allocation5 + $0x28] sm:$0xff]
        %v183 = vld [vmem:[#allocation5 + $0x30] sm:$0xff]
        %v184 = vld [vmem:[#allocation5 + $0x38] sm:$0xff]
        %v185 = vld [vmem:[%s152] sm:$0xff]
        %v186 = vld [vmem:[%s152 + $0x18] sm:$0xff]
        %v187 = vld [vmem:[%s152 + $0x30] sm:$0xff]
        %v188 = vld [vmem:[%s152 + $0x48] sm:$0xff]
        %v189 = vld [vmem:[%s152 + $0x60] sm:$0xff]
        %v190 = vld [vmem:[%s152 + $0x78] sm:$0xff]
        %v191 = vld [vmem:[%s152 + $0x90] sm:$0xff]
        %v192 = vld [vmem:[%s152 + $0xa8] sm:$0xff]
        %v193 = vld [vmem:[%s152 + $0x9] sm:$0xff]
        %v194 = vld [vmem:[%s152 + $0x21] sm:$0xff]
        %v195 = vld [vmem:[%s152 + $0x39] sm:$0xff]
        %v196 = vld [vmem:[%s152 + $0x51] sm:$0xff]
        %v197 = vld [vmem:[%s152 + $0x69] sm:$0xff]
        %v198 = vld [vmem:[%s152 + $0x81] sm:$0xff]
        %v199 = vld [vmem:[%s152 + $0x99] sm:$0xff]
        %v200 = vld [vmem:[%s152 + $0xb1] sm:$0xff]
        %v201 = vld [vmem:[%s152 + $0x1] sm:$0xff]
        %v202 = vld [vmem:[%s152 + $0x19] sm:$0xff]
        %v203 = vld [vmem:[%s152 + $0x31] sm:$0xff]
        %v204 = vld [vmem:[%s152 + $0x49] sm:$0xff]
        %v205 = vld [vmem:[%s152 + $0x61] sm:$0xff]
        %v206 = vld [vmem:[%s152 + $0x79] sm:$0xff]
        %v207 = vld [vmem:[%s152 + $0x91] sm:$0xff]
        %v208 = vld [vmem:[%s152 + $0xa9] sm:$0xff]
        %v209 = vld [vmem:[%s152 + $0xa] sm:$0xff]
        %v210 = vld [vmem:[%s152 + $0x22] sm:$0xff]
        %v211 = vld [vmem:[%s152 + $0x3a] sm:$0xff]
        %v212 = vld [vmem:[%s152 + $0x52] sm:$0xff]
        %v213 = vld [vmem:[%s152 + $0x6a] sm:$0xff]
        %v214 = vld [vmem:[%s152 + $0x82] sm:$0xff]
        %v215 = vld [vmem:[%s152 + $0x9a] sm:$0xff]
        %v216 = vld [vmem:[%s152 + $0xb2] sm:$0xff]
        %s217 = scalar_lea.vmem %s152, 216 [#allocation2]
        %v218 = vld [vmem:[%s217] sm:$0xff]
        %v219 = vld [vmem:[%s217 + $0x18] sm:$0xff]
        %v220 = vld [vmem:[%s217 + $0x30] sm:$0xff]
        %v221 = vld [vmem:[%s217 + $0x48] sm:$0xff]
        %v222 = vld [vmem:[%s217 + $0x60] sm:$0xff]
        %v223 = vld [vmem:[%s217 + $0x78] sm:$0xff]
        %v224 = vld [vmem:[%s217 + $0x90] sm:$0xff]
        %v225 = vld [vmem:[%s217 + $0xa8] sm:$0xff]
        %v226 = vld [vmem:[%s217 + $0x9] sm:$0xff]
        %v227 = vld [vmem:[%s217 + $0x21] sm:$0xff]
        %v228 = vld [vmem:[%s217 + $0x39] sm:$0xff]
        %v229 = vld [vmem:[%s217 + $0x51] sm:$0xff]
        %v230 = vld [vmem:[%s217 + $0x69] sm:$0xff]
        %v231 = vld [vmem:[%s217 + $0x81] sm:$0xff]
        %v232 = vld [vmem:[%s217 + $0x99] sm:$0xff]
        %v233 = vld [vmem:[%s217 + $0xb1] sm:$0xff]
        %v234 = vld [vmem:[%s217 + $0x1] sm:$0xff]
        %v235 = vld [vmem:[%s217 + $0x19] sm:$0xff]
        %v236 = vld [vmem:[%s217 + $0x31] sm:$0xff]
        %v237 = vld [vmem:[%s217 + $0x49] sm:$0xff]
        %v238 = vld [vmem:[%s217 + $0x61] sm:$0xff]
        %v239 = vld [vmem:[%s217 + $0x79] sm:$0xff]
        %v240 = vld [vmem:[%s217 + $0x91] sm:$0xff]
        %v241 = vld [vmem:[%s217 + $0xa9] sm:$0xff]
        %v242 = vld [vmem:[%s217 + $0xa] sm:$0xff]
        %v243 = vld [vmem:[%s217 + $0x22] sm:$0xff]
        %v244 = vld [vmem:[%s217 + $0x3a] sm:$0xff]
        %v245 = vld [vmem:[%s217 + $0x52] sm:$0xff]
        %v246 = vld [vmem:[%s217 + $0x6a] sm:$0xff]
        %v247 = vld [vmem:[%s217 + $0x82] sm:$0xff]
        %v248 = vld [vmem:[%s217 + $0x9a] sm:$0xff]
        %v249 = vld [vmem:[%s217 + $0xb2] sm:$0xff]
        %s250 = scalar_lea.vmem %s152, 24 [#allocation2]
        %v251 = vld [vmem:[%s250] sm:$0xff]
        %v252 = vld [vmem:[%s250 + $0x18] sm:$0xff]
        %v253 = vld [vmem:[%s250 + $0x30] sm:$0xff]
        %v254 = vld [vmem:[%s250 + $0x48] sm:$0xff]
        %v255 = vld [vmem:[%s250 + $0x60] sm:$0xff]
        %v256 = vld [vmem:[%s250 + $0x78] sm:$0xff]
        %v257 = vld [vmem:[%s250 + $0x90] sm:$0xff]
        %v258 = vld [vmem:[%s250 + $0xa8] sm:$0xff]
        %v259 = vld [vmem:[%s250 + $0x9] sm:$0xff]
        %v260 = vld [vmem:[%s250 + $0x21] sm:$0xff]
        %v261 = vld [vmem:[%s250 + $0x39] sm:$0xff]
        %v262 = vld [vmem:[%s250 + $0x51] sm:$0xff]
        %v263 = vld [vmem:[%s250 + $0x69] sm:$0xff]
        %v264 = vld [vmem:[%s250 + $0x81] sm:$0xff]
        %v265 = vld [vmem:[%s250 + $0x99] sm:$0xff]
        %v266 = vld [vmem:[%s250 + $0xb1] sm:$0xff]
        %v267 = vld [vmem:[%s250 + $0x1] sm:$0xff]
        %v268 = vld [vmem:[%s250 + $0x19] sm:$0xff]
        %v269 = vld [vmem:[%s250 + $0x31] sm:$0xff]
        %v270 = vld [vmem:[%s250 + $0x49] sm:$0xff]
        %v271 = vld [vmem:[%s250 + $0x61] sm:$0xff]
        %v272 = vld [vmem:[%s250 + $0x79] sm:$0xff]
        %v273 = vld [vmem:[%s250 + $0x91] sm:$0xff]
        %v274 = vld [vmem:[%s250 + $0xa9] sm:$0xff]
        %v275 = vld [vmem:[%s250 + $0xa] sm:$0xff]
        %v276 = vld [vmem:[%s250 + $0x22] sm:$0xff]
        %v277 = vld [vmem:[%s250 + $0x3a] sm:$0xff]
        %v278 = vld [vmem:[%s250 + $0x52] sm:$0xff]
        %v279 = vld [vmem:[%s250 + $0x6a] sm:$0xff]
        %v280 = vld [vmem:[%s250 + $0x82] sm:$0xff]
        %v281 = vld [vmem:[%s250 + $0x9a] sm:$0xff]
        %v282 = vld [vmem:[%s250 + $0xb2] sm:$0xff]
        %s283 = scalar_lea.vmem %s152, 240 [#allocation2]
        %v284 = vld [vmem:[%s283] sm:$0xff]
        %v285 = vld [vmem:[%s283 + $0x18] sm:$0xff]
        %v286 = vld [vmem:[%s283 + $0x30] sm:$0xff]
        %v287 = vld [vmem:[%s283 + $0x48] sm:$0xff]
        %v288 = vld [vmem:[%s283 + $0x60] sm:$0xff]
        %v289 = vld [vmem:[%s283 + $0x78] sm:$0xff]
        %v290 = vld [vmem:[%s283 + $0x90] sm:$0xff]
        %v291 = vld [vmem:[%s283 + $0xa8] sm:$0xff]
        %v292 = vld [vmem:[%s283 + $0x9] sm:$0xff]
        %v293 = vld [vmem:[%s283 + $0x21] sm:$0xff]
        %v294 = vld [vmem:[%s283 + $0x39] sm:$0xff]
        %v295 = vld [vmem:[%s283 + $0x51] sm:$0xff]
        %v296 = vld [vmem:[%s283 + $0x69] sm:$0xff]
        %v297 = vld [vmem:[%s283 + $0x81] sm:$0xff]
        %v298 = vld [vmem:[%s283 + $0x99] sm:$0xff]
        %v299 = vld [vmem:[%s283 + $0xb1] sm:$0xff]
        %v300 = vld [vmem:[%s283 + $0x1] sm:$0xff]
        %v301 = vld [vmem:[%s283 + $0x19] sm:$0xff]
        %v302 = vld [vmem:[%s283 + $0x31] sm:$0xff]
        %v303 = vld [vmem:[%s283 + $0x49] sm:$0xff]
        %v304 = vld [vmem:[%s283 + $0x61] sm:$0xff]
        %v305 = vld [vmem:[%s283 + $0x79] sm:$0xff]
        %v306 = vld [vmem:[%s283 + $0x91] sm:$0xff]
        %v307 = vld [vmem:[%s283 + $0xa9] sm:$0xff]
        %v308 = vld [vmem:[%s283 + $0xa] sm:$0xff]
        %v309 = vld [vmem:[%s283 + $0x22] sm:$0xff]
        %v310 = vld [vmem:[%s283 + $0x3a] sm:$0xff]
        %v311 = vld [vmem:[%s283 + $0x52] sm:$0xff]
        %v312 = vld [vmem:[%s283 + $0x6a] sm:$0xff]
        %v313 = vld [vmem:[%s283 + $0x82] sm:$0xff]
        %v314 = vld [vmem:[%s283 + $0x9a] sm:$0xff]
        %v315 = vld [vmem:[%s283 + $0xb2] sm:$0xff]
        %324 = vrot.lane.b32.xlu0 %v193, 4
        %v325 = vpop.permute.xlu0 %324
        %326 = vrot.lane.b32.xlu0 %v194, 4
        %v327 = vpop.permute.xlu0 %326
        %328 = vrot.lane.b32.xlu0 %v195, 4
        %v329 = vpop.permute.xlu0 %328
        %330 = vrot.lane.b32.xlu0 %v196, 4
        %v331 = vpop.permute.xlu0 %330
        %332 = vrot.lane.b32.xlu0 %v197, 4
        %v333 = vpop.permute.xlu0 %332
        %334 = vrot.lane.b32.xlu0 %v198, 4
        %v335 = vpop.permute.xlu0 %334
        %336 = vrot.lane.b32.xlu0 %v199, 4
        %v337 = vpop.permute.xlu0 %336
        %338 = vrot.lane.b32.xlu0 %v200, 4
        %v339 = vpop.permute.xlu0 %338
        %356 = vrot.lane.b32.xlu0 %v201, 8
        %v357 = vpop.permute.xlu0 %356
        %358 = vrot.lane.b32.xlu0 %v202, 8
        %v359 = vpop.permute.xlu0 %358
        %360 = vrot.lane.b32.xlu0 %v203, 8
        %v361 = vpop.permute.xlu0 %360
        %362 = vrot.lane.b32.xlu0 %v204, 8
        %v363 = vpop.permute.xlu0 %362
        %364 = vrot.lane.b32.xlu0 %v205, 8
        %v365 = vpop.permute.xlu0 %364
        %366 = vrot.lane.b32.xlu0 %v206, 8
        %v367 = vpop.permute.xlu0 %366
        %368 = vrot.lane.b32.xlu0 %v207, 8
        %v369 = vpop.permute.xlu0 %368
        %370 = vrot.lane.b32.xlu0 %v208, 8
        %v371 = vpop.permute.xlu0 %370
        %388 = vrot.lane.b32.xlu0 %v209, 12
        %v389 = vpop.permute.xlu0 %388
        %390 = vrot.lane.b32.xlu0 %v210, 12
        %v391 = vpop.permute.xlu0 %390
        %392 = vrot.lane.b32.xlu0 %v211, 12
        %v393 = vpop.permute.xlu0 %392
        %394 = vrot.lane.b32.xlu0 %v212, 12
        %v395 = vpop.permute.xlu0 %394
        %396 = vrot.lane.b32.xlu0 %v213, 12
        %v397 = vpop.permute.xlu0 %396
        %398 = vrot.lane.b32.xlu0 %v214, 12
        %v399 = vpop.permute.xlu0 %398
        %400 = vrot.lane.b32.xlu0 %v215, 12
        %v401 = vpop.permute.xlu0 %400
        %402 = vrot.lane.b32.xlu0 %v216, 12
        %v403 = vpop.permute.xlu0 %402
        %420 = vrot.lane.b32.xlu0 %v218, 16
        %v421 = vpop.permute.xlu0 %420
        %422 = vrot.lane.b32.xlu0 %v219, 16
        %v423 = vpop.permute.xlu0 %422
        %424 = vrot.lane.b32.xlu0 %v220, 16
        %v425 = vpop.permute.xlu0 %424
        %426 = vrot.lane.b32.xlu0 %v221, 16
        %v427 = vpop.permute.xlu0 %426
        %428 = vrot.lane.b32.xlu0 %v222, 16
        %v429 = vpop.permute.xlu0 %428
        %430 = vrot.lane.b32.xlu0 %v223, 16
        %v431 = vpop.permute.xlu0 %430
        %432 = vrot.lane.b32.xlu0 %v224, 16
        %v433 = vpop.permute.xlu0 %432
        %434 = vrot.lane.b32.xlu0 %v225, 16
        %v435 = vpop.permute.xlu0 %434
        %452 = vrot.lane.b32.xlu0 %v226, 20
        %v453 = vpop.permute.xlu0 %452
        %454 = vrot.lane.b32.xlu0 %v227, 20
        %v455 = vpop.permute.xlu0 %454
        %456 = vrot.lane.b32.xlu0 %v228, 20
        %v457 = vpop.permute.xlu0 %456
        %458 = vrot.lane.b32.xlu0 %v229, 20
        %v459 = vpop.permute.xlu0 %458
        %460 = vrot.lane.b32.xlu0 %v230, 20
        %v461 = vpop.permute.xlu0 %460
        %462 = vrot.lane.b32.xlu0 %v231, 20
        %v463 = vpop.permute.xlu0 %462
        %464 = vrot.lane.b32.xlu0 %v232, 20
        %v465 = vpop.permute.xlu0 %464
        %466 = vrot.lane.b32.xlu0 %v233, 20
        %v467 = vpop.permute.xlu0 %466
        %484 = vrot.lane.b32.xlu0 %v234, 24
        %v485 = vpop.permute.xlu0 %484
        %486 = vrot.lane.b32.xlu0 %v235, 24
        %v487 = vpop.permute.xlu0 %486
        %488 = vrot.lane.b32.xlu0 %v236, 24
        %v489 = vpop.permute.xlu0 %488
        %490 = vrot.lane.b32.xlu0 %v237, 24
        %v491 = vpop.permute.xlu0 %490
        %492 = vrot.lane.b32.xlu0 %v238, 24
        %v493 = vpop.permute.xlu0 %492
        %494 = vrot.lane.b32.xlu0 %v239, 24
        %v495 = vpop.permute.xlu0 %494
        %496 = vrot.lane.b32.xlu0 %v240, 24
        %v497 = vpop.permute.xlu0 %496
        %498 = vrot.lane.b32.xlu0 %v241, 24
        %v499 = vpop.permute.xlu0 %498
        %516 = vrot.lane.b32.xlu0 %v242, 28
        %v517 = vpop.permute.xlu0 %516
        %518 = vrot.lane.b32.xlu0 %v243, 28
        %v519 = vpop.permute.xlu0 %518
        %520 = vrot.lane.b32.xlu0 %v244, 28
        %v521 = vpop.permute.xlu0 %520
        %522 = vrot.lane.b32.xlu0 %v245, 28
        %v523 = vpop.permute.xlu0 %522
        %524 = vrot.lane.b32.xlu0 %v246, 28
        %v525 = vpop.permute.xlu0 %524
        %526 = vrot.lane.b32.xlu0 %v247, 28
        %v527 = vpop.permute.xlu0 %526
        %528 = vrot.lane.b32.xlu0 %v248, 28
        %v529 = vpop.permute.xlu0 %528
        %530 = vrot.lane.b32.xlu0 %v249, 28
        %v531 = vpop.permute.xlu0 %530
        %548 = vrot.lane.b32.xlu0 %v251, 32
        %v549 = vpop.permute.xlu0 %548
        %550 = vrot.lane.b32.xlu0 %v252, 32
        %v551 = vpop.permute.xlu0 %550
        %552 = vrot.lane.b32.xlu0 %v253, 32
        %v553 = vpop.permute.xlu0 %552
        %554 = vrot.lane.b32.xlu0 %v254, 32
        %v555 = vpop.permute.xlu0 %554
        %556 = vrot.lane.b32.xlu0 %v255, 32
        %v557 = vpop.permute.xlu0 %556
        %558 = vrot.lane.b32.xlu0 %v256, 32
        %v559 = vpop.permute.xlu0 %558
        %560 = vrot.lane.b32.xlu0 %v257, 32
        %v561 = vpop.permute.xlu0 %560
        %562 = vrot.lane.b32.xlu0 %v258, 32
        %v563 = vpop.permute.xlu0 %562
        %580 = vrot.lane.b32.xlu0 %v259, 36
        %v581 = vpop.permute.xlu0 %580
        %582 = vrot.lane.b32.xlu0 %v260, 36
        %v583 = vpop.permute.xlu0 %582
        %584 = vrot.lane.b32.xlu0 %v261, 36
        %v585 = vpop.permute.xlu0 %584
        %586 = vrot.lane.b32.xlu0 %v262, 36
        %v587 = vpop.permute.xlu0 %586
        %588 = vrot.lane.b32.xlu0 %v263, 36
        %v589 = vpop.permute.xlu0 %588
        %590 = vrot.lane.b32.xlu0 %v264, 36
        %v591 = vpop.permute.xlu0 %590
        %592 = vrot.lane.b32.xlu0 %v265, 36
        %v593 = vpop.permute.xlu0 %592
        %594 = vrot.lane.b32.xlu0 %v266, 36
        %v595 = vpop.permute.xlu0 %594
        %612 = vrot.lane.b32.xlu0 %v267, 40
        %v613 = vpop.permute.xlu0 %612
        %614 = vrot.lane.b32.xlu0 %v268, 40
        %v615 = vpop.permute.xlu0 %614
        %616 = vrot.lane.b32.xlu0 %v269, 40
        %v617 = vpop.permute.xlu0 %616
        %618 = vrot.lane.b32.xlu0 %v270, 40
        %v619 = vpop.permute.xlu0 %618
        %620 = vrot.lane.b32.xlu0 %v271, 40
        %v621 = vpop.permute.xlu0 %620
        %622 = vrot.lane.b32.xlu0 %v272, 40
        %v623 = vpop.permute.xlu0 %622
        %624 = vrot.lane.b32.xlu0 %v273, 40
        %v625 = vpop.permute.xlu0 %624
        %626 = vrot.lane.b32.xlu0 %v274, 40
        %v627 = vpop.permute.xlu0 %626
        %644 = vrot.lane.b32.xlu0 %v275, 44
        %v645 = vpop.permute.xlu0 %644
        %646 = vrot.lane.b32.xlu0 %v276, 44
        %v647 = vpop.permute.xlu0 %646
        %648 = vrot.lane.b32.xlu0 %v277, 44
        %v649 = vpop.permute.xlu0 %648
        %650 = vrot.lane.b32.xlu0 %v278, 44
        %v651 = vpop.permute.xlu0 %650
        %652 = vrot.lane.b32.xlu0 %v279, 44
        %v653 = vpop.permute.xlu0 %652
        %654 = vrot.lane.b32.xlu0 %v280, 44
        %v655 = vpop.permute.xlu0 %654
        %656 = vrot.lane.b32.xlu0 %v281, 44
        %v657 = vpop.permute.xlu0 %656
        %658 = vrot.lane.b32.xlu0 %v282, 44
        %v659 = vpop.permute.xlu0 %658
        %676 = vrot.lane.b32.xlu0 %v284, 48
        %v677 = vpop.permute.xlu0 %676
        %678 = vrot.lane.b32.xlu0 %v285, 48
        %v679 = vpop.permute.xlu0 %678
        %680 = vrot.lane.b32.xlu0 %v286, 48
        %v681 = vpop.permute.xlu0 %680
        %682 = vrot.lane.b32.xlu0 %v287, 48
        %v683 = vpop.permute.xlu0 %682
        %684 = vrot.lane.b32.xlu0 %v288, 48
        %v685 = vpop.permute.xlu0 %684
        %686 = vrot.lane.b32.xlu0 %v289, 48
        %v687 = vpop.permute.xlu0 %686
        %688 = vrot.lane.b32.xlu0 %v290, 48
        %v689 = vpop.permute.xlu0 %688
        %690 = vrot.lane.b32.xlu0 %v291, 48
        %v691 = vpop.permute.xlu0 %690
        %708 = vrot.lane.b32.xlu0 %v292, 52
        %v709 = vpop.permute.xlu0 %708
        %710 = vrot.lane.b32.xlu0 %v293, 52
        %v711 = vpop.permute.xlu0 %710
        %712 = vrot.lane.b32.xlu0 %v294, 52
        %v713 = vpop.permute.xlu0 %712
        %714 = vrot.lane.b32.xlu0 %v295, 52
        %v715 = vpop.permute.xlu0 %714
        %716 = vrot.lane.b32.xlu0 %v296, 52
        %v717 = vpop.permute.xlu0 %716
        %718 = vrot.lane.b32.xlu0 %v297, 52
        %v719 = vpop.permute.xlu0 %718
        %720 = vrot.lane.b32.xlu0 %v298, 52
        %v721 = vpop.permute.xlu0 %720
        %722 = vrot.lane.b32.xlu0 %v299, 52
        %v723 = vpop.permute.xlu0 %722
        %740 = vrot.lane.b32.xlu0 %v300, 56
        %v741 = vpop.permute.xlu0 %740
        %742 = vrot.lane.b32.xlu0 %v301, 56
        %v743 = vpop.permute.xlu0 %742
        %744 = vrot.lane.b32.xlu0 %v302, 56
        %v745 = vpop.permute.xlu0 %744
        %746 = vrot.lane.b32.xlu0 %v303, 56
        %v747 = vpop.permute.xlu0 %746
        %748 = vrot.lane.b32.xlu0 %v304, 56
        %v749 = vpop.permute.xlu0 %748
        %750 = vrot.lane.b32.xlu0 %v305, 56
        %v751 = vpop.permute.xlu0 %750
        %752 = vrot.lane.b32.xlu0 %v306, 56
        %v753 = vpop.permute.xlu0 %752
        %754 = vrot.lane.b32.xlu0 %v307, 56
        %v755 = vpop.permute.xlu0 %754
        %772 = vrot.lane.b32.xlu0 %v308, 60
        %v773 = vpop.permute.xlu0 %772
        %774 = vrot.lane.b32.xlu0 %v309, 60
        %v775 = vpop.permute.xlu0 %774
        %776 = vrot.lane.b32.xlu0 %v310, 60
        %v777 = vpop.permute.xlu0 %776
        %778 = vrot.lane.b32.xlu0 %v311, 60
        %v779 = vpop.permute.xlu0 %778
        %780 = vrot.lane.b32.xlu0 %v312, 60
        %v781 = vpop.permute.xlu0 %780
        %782 = vrot.lane.b32.xlu0 %v313, 60
        %v783 = vpop.permute.xlu0 %782
        %784 = vrot.lane.b32.xlu0 %v314, 60
        %v785 = vpop.permute.xlu0 %784
        %786 = vrot.lane.b32.xlu0 %v315, 60
        %v787 = vpop.permute.xlu0 %786
        %vm796 = vcmask 31744
        %v797 = vsel %vm796, %v185, %v325
        %v798 = vsel %vm796, %v186, %v327
        %v799 = vsel %vm796, %v187, %v329
        %v800 = vsel %vm796, %v188, %v331
        %v801 = vsel %vm796, %v189, %v333
        %v802 = vsel %vm796, %v190, %v335
        %v803 = vsel %vm796, %v191, %v337
        %v804 = vsel %vm796, %v192, %v339
        %vm805 = vcmask 64512
        %v806 = vsel %vm805, %v797, %v357
        %v807 = vsel %vm805, %v798, %v359
        %v808 = vsel %vm805, %v799, %v361
        %v809 = vsel %vm805, %v800, %v363
        %v810 = vsel %vm805, %v801, %v365
        %v811 = vsel %vm805, %v802, %v367
        %v812 = vsel %vm805, %v803, %v369
        %v813 = vsel %vm805, %v804, %v371
        %vm814 = vcmask 97280
        %v815 = vsel %vm814, %v806, %v389
        %v816 = vsel %vm814, %v807, %v391
        %v817 = vsel %vm814, %v808, %v393
        %v818 = vsel %vm814, %v809, %v395
        %v819 = vsel %vm814, %v810, %v397
        %v820 = vsel %vm814, %v811, %v399
        %v821 = vsel %vm814, %v812, %v401
        %v822 = vsel %vm814, %v813, %v403
        %vm823 = vcmask 130048
        %v824 = vsel %vm823, %v815, %v421
        %v825 = vsel %vm823, %v816, %v423
        %v826 = vsel %vm823, %v817, %v425
        %v827 = vsel %vm823, %v818, %v427
        %v828 = vsel %vm823, %v819, %v429
        %v829 = vsel %vm823, %v820, %v431
        %v830 = vsel %vm823, %v821, %v433
        %v831 = vsel %vm823, %v822, %v435
        %vm832 = vcmask 162816
        %v833 = vsel %vm832, %v824, %v453
        %v834 = vsel %vm832, %v825, %v455
        %v835 = vsel %vm832, %v826, %v457
        %v836 = vsel %vm832, %v827, %v459
        %v837 = vsel %vm832, %v828, %v461
        %v838 = vsel %vm832, %v829, %v463
        %v839 = vsel %vm832, %v830, %v465
        %v840 = vsel %vm832, %v831, %v467
        %vm841 = vcmask 195584
        %v842 = vsel %vm841, %v833, %v485
        %v843 = vsel %vm841, %v834, %v487
        %v844 = vsel %vm841, %v835, %v489
        %v845 = vsel %vm841, %v836, %v491
        %v846 = vsel %vm841, %v837, %v493
        %v847 = vsel %vm841, %v838, %v495
        %v848 = vsel %vm841, %v839, %v497
        %v849 = vsel %vm841, %v840, %v499
        %vm850 = vcmask 228352
        %v851 = vsel %vm850, %v842, %v517
        %v852 = vsel %vm850, %v843, %v519
        %v853 = vsel %vm850, %v844, %v521
        %v854 = vsel %vm850, %v845, %v523
        %v855 = vsel %vm850, %v846, %v525
        %v856 = vsel %vm850, %v847, %v527
        %v857 = vsel %vm850, %v848, %v529
        %v858 = vsel %vm850, %v849, %v531
        %vm859 = vcmask 261120
        %v860 = vsel %vm859, %v851, %v549
        %v861 = vsel %vm859, %v852, %v551
        %v862 = vsel %vm859, %v853, %v553
        %v863 = vsel %vm859, %v854, %v555
        %v864 = vsel %vm859, %v855, %v557
        %v865 = vsel %vm859, %v856, %v559
        %v866 = vsel %vm859, %v857, %v561
        %v867 = vsel %vm859, %v858, %v563
        %vm868 = vcmask 293888
        %v869 = vsel %vm868, %v860, %v581
        %v870 = vsel %vm868, %v861, %v583
        %v871 = vsel %vm868, %v862, %v585
        %v872 = vsel %vm868, %v863, %v587
        %v873 = vsel %vm868, %v864, %v589
        %v874 = vsel %vm868, %v865, %v591
        %v875 = vsel %vm868, %v866, %v593
        %v876 = vsel %vm868, %v867, %v595
        %vm877 = vcmask 326656
        %v878 = vsel %vm877, %v869, %v613
        %v879 = vsel %vm877, %v870, %v615
        %v880 = vsel %vm877, %v871, %v617
        %v881 = vsel %vm877, %v872, %v619
        %v882 = vsel %vm877, %v873, %v621
        %v883 = vsel %vm877, %v874, %v623
        %v884 = vsel %vm877, %v875, %v625
        %v885 = vsel %vm877, %v876, %v627
        %vm886 = vcmask 359424
        %v887 = vsel %vm886, %v878, %v645
        %v888 = vsel %vm886, %v879, %v647
        %v889 = vsel %vm886, %v880, %v649
        %v890 = vsel %vm886, %v881, %v651
        %v891 = vsel %vm886, %v882, %v653
        %v892 = vsel %vm886, %v883, %v655
        %v893 = vsel %vm886, %v884, %v657
        %v894 = vsel %vm886, %v885, %v659
        %vm895 = vcmask 392192
        %v896 = vsel %vm895, %v887, %v677
        %v897 = vsel %vm895, %v888, %v679
        %v898 = vsel %vm895, %v889, %v681
        %v899 = vsel %vm895, %v890, %v683
        %v900 = vsel %vm895, %v891, %v685
        %v901 = vsel %vm895, %v892, %v687
        %v902 = vsel %vm895, %v893, %v689
        %v903 = vsel %vm895, %v894, %v691
        %vm904 = vcmask 424960
        %v905 = vsel %vm904, %v896, %v709
        %v906 = vsel %vm904, %v897, %v711
        %v907 = vsel %vm904, %v898, %v713
        %v908 = vsel %vm904, %v899, %v715
        %v909 = vsel %vm904, %v900, %v717
        %v910 = vsel %vm904, %v901, %v719
        %v911 = vsel %vm904, %v902, %v721
        %v912 = vsel %vm904, %v903, %v723
        %vm913 = vcmask 457728
        %v914 = vsel %vm913, %v905, %v741
        %v915 = vsel %vm913, %v906, %v743
        %v916 = vsel %vm913, %v907, %v745
        %v917 = vsel %vm913, %v908, %v747
        %v918 = vsel %vm913, %v909, %v749
        %v919 = vsel %vm913, %v910, %v751
        %v920 = vsel %vm913, %v911, %v753
        %v921 = vsel %vm913, %v912, %v755
        %vm922 = vcmask 490496
        %v923 = vsel %vm922, %v914, %v773
        %v924 = vsel %vm922, %v915, %v775
        %v925 = vsel %vm922, %v916, %v777
        %v926 = vsel %vm922, %v917, %v779
        %v927 = vsel %vm922, %v918, %v781
        %v928 = vsel %vm922, %v919, %v783
        %v929 = vsel %vm922, %v920, %v785
        %v930 = vsel %vm922, %v921, %v787
        %vm931 = vcmask 523264
        %v933 = vsel %vm931, %v923, 0
        %v936 = vsel %vm931, %v924, 0
        %v939 = vsel %vm931, %v925, 0
        %v942 = vsel %vm931, %v926, 0
        %v945 = vsel %vm931, %v927, 0
        %v948 = vsel %vm931, %v928, 0
        %v951 = vsel %vm931, %v929, 0
        %v954 = vsel %vm931, %v930, 0
        %956 = vmatprep.subr.mxu0 0.0
        %957 = vmatpush1.msra.mxu0 %v177
        %958 = vmatprep.subr.mxu0 0.0
        %959 = vmatpush1.msra.mxu0 %v178
        %960 = vmatprep.subr.mxu0 0.0
        %961 = vmatpush1.msra.mxu0 %v179
        %962 = vmatprep.subr.mxu0 0.0
        %963 = vmatpush1.msra.mxu0 %v180
        %964 = vmatprep.subr.mxu0 0.0
        %965 = vmatpush1.msra.mxu0 %v181
        %966 = vmatprep.subr.mxu0 0.0
        %967 = vmatpush1.msra.mxu0 %v182
        %968 = vmatprep.subr.mxu0 0.0
        %969 = vmatpush1.msra.mxu0 %v183
        %970 = vmatprep.subr.mxu0 0.0
        %971 = vmatpush1.msra.mxu0 %v184
        %972 = vmatprep.subr.mxu0 0.0
        %973 = vmatpush1.msra.mxu0 0.0
        %974 = vmatprep.subr.mxu0 0.0
        %975 = vmatpush1.msra.mxu0 0.0
        %976 = vmatprep.subr.mxu0 0.0
        %977 = vmatpush1.msra.mxu0 0.0
        %978 = vmatprep.subr.mxu0 0.0
        %979 = vmatpush1.msra.mxu0 0.0
        %980 = vmatprep.subr.mxu0 0.0
        %981 = vmatpush1.msra.mxu0 0.0
        %982 = vmatprep.subr.mxu0 0.0
        %983 = vmatpush1.msra.mxu0 0.0
        %984 = vmatprep.subr.mxu0 0.0
        %985 = vmatpush1.msra.mxu0 0.0
        %986 = vmatprep.subr.mxu0 0.0
        %987 = vmatpush1.msra.mxu0 0.0
        %988 = vmatprep.subr.mxu0 0.0
        %989 = vmatpush1.msra.mxu0 0.0
        %990 = vmatprep.subr.mxu0 0.0
        %991 = vmatpush1.msra.mxu0 0.0
        %992 = vmatprep.subr.mxu0 0.0
        %993 = vmatpush1.msra.mxu0 0.0
        %994 = vmatprep.subr.mxu0 0.0
        %995 = vmatpush1.msra.mxu0 0.0
        %996 = vmatprep.subr.mxu0 0.0
        %997 = vmatpush1.msra.mxu0 0.0
        %998 = vmatprep.subr.mxu0 0.0
        %999 = vmatpush1.msra.mxu0 0.0
        %1000 = vmatprep.subr.mxu0 0.0
        %1001 = vmatpush1.msra.mxu0 0.0
        %1002 = vmatprep.subr.mxu0 0.0
        %1003 = vmatpush1.msra.mxu0 0.0
        %1004 = vmatprep.subr.mxu0 0.0
        %1005 = vmatpush1.msra.mxu0 0.0
        %1006 = vmatprep.subr.mxu0 0.0
        %1007 = vmatpush1.msra.mxu0 0.0
        %1008 = vmatprep.subr.mxu0 0.0
        %1009 = vmatpush1.msra.mxu0 0.0
        %1010 = vmatprep.subr.mxu0 0.0
        %1011 = vmatpush1.msra.mxu0 0.0
        %1012 = vmatprep.subr.mxu0 0.0
        %1013 = vmatpush1.msra.mxu0 0.0
        %1014 = vmatprep.subr.mxu0 0.0
        %1015 = vmatpush1.msra.mxu0 0.0
        %1016 = vmatprep.subr.mxu0 0.0
        %1017 = vmatpush1.msra.mxu0 0.0
        %1018 = vmatprep.subr.mxu0 0.0
        %1019 = vmatpush1.msra.mxu0 0.0
        %1020 = vmatprep.mubr.f32.mxu0 0.0
        %1021 = vmatmul.mubr.f32.gmra.mrb[0].mxu0 %v933
        %v1022 = vpop.f32.mrb[0].mxu0
        %v1023 = vadd.f32 0.0, %v1022
        %v1024 = vpop.f32.mrb[0].mxu0
        %1025 = vmatprep.mubr.f32.mxu0 0.0
        %1026 = vmatmul.mubr.f32.gmra.mrb[0].mxu0 %v936
        %v1027 = vpop.f32.mrb[0].mxu0
        %v1028 = vadd.f32 0.0, %v1027
        %v1029 = vpop.f32.mrb[0].mxu0
        %1030 = vmatprep.mubr.f32.mxu0 0.0
        %1031 = vmatmul.mubr.f32.gmra.mrb[0].mxu0 %v939
        %v1032 = vpop.f32.mrb[0].mxu0
        %v1033 = vadd.f32 0.0, %v1032
        %v1034 = vpop.f32.mrb[0].mxu0
        %1035 = vmatprep.mubr.f32.mxu0 0.0
        %1036 = vmatmul.mubr.f32.gmra.mrb[0].mxu0 %v942
        %v1037 = vpop.f32.mrb[0].mxu0
        %v1038 = vadd.f32 0.0, %v1037
        %v1039 = vpop.f32.mrb[0].mxu0
        %1040 = vmatprep.mubr.f32.mxu0 0.0
        %1041 = vmatmul.mubr.f32.gmra.mrb[0].mxu0 %v945
        %v1042 = vpop.f32.mrb[0].mxu0
        %v1043 = vadd.f32 0.0, %v1042
        %v1044 = vpop.f32.mrb[0].mxu0
        %1045 = vmatprep.mubr.f32.mxu0 0.0
        %1046 = vmatmul.mubr.f32.gmra.mrb[0].mxu0 %v948
        %v1047 = vpop.f32.mrb[0].mxu0
        %v1048 = vadd.f32 0.0, %v1047
        %v1049 = vpop.f32.mrb[0].mxu0
        %1050 = vmatprep.mubr.f32.mxu0 0.0
        %1051 = vmatmul.mubr.f32.gmra.mrb[0].mxu0 %v951
        %v1052 = vpop.f32.mrb[0].mxu0
        %v1053 = vadd.f32 0.0, %v1052
        %v1054 = vpop.f32.mrb[0].mxu0
        %1055 = vmatprep.mubr.f32.mxu0 0.0
        %1056 = vmatmul.mubr.f32.gmra.mrb[0].mxu0 %v954
        %v1057 = vpop.f32.mrb[0].mxu0
        %v1058 = vadd.f32 0.0, %v1057
        %v1059 = vpop.f32.mrb[0].mxu0
        %1060 = vdwg.mxu0
        %1061 = vst.msk [vmem:[%s176] sm:$0xff] %vm859, %v1023
        %1062 = vst.msk [vmem:[%s176 + $0x8] sm:$0xff] %vm859, %v1028
        %1063 = vst.msk [vmem:[%s176 + $0x10] sm:$0xff] %vm859, %v1033
        %1064 = vst.msk [vmem:[%s176 + $0x18] sm:$0xff] %vm859, %v1038
        %1065 = vst.msk [vmem:[%s176 + $0x20] sm:$0xff] %vm859, %v1043
        %1066 = vst.msk [vmem:[%s176 + $0x28] sm:$0xff] %vm859, %v1048
        %1067 = vst.msk [vmem:[%s176 + $0x30] sm:$0xff] %vm859, %v1053
        %1068 = vst.msk [vmem:[%s176 + $0x38] sm:$0xff] %vm859, %v1058
        %s1069 = sand.u32 %s75, 1
        %s1070 = scalar_lea.sflag [#allocation4], %s1069
        %s1071 = sand.u32 %s75, 1
        %s1072 = smul.addr %s1071, 64
        %s1073 = scalar_lea.vmem [#allocation7], %s1072
        // Predicated region
        $region37: #{tpu_custom_call.1} parent=27 // pred_check
          %p1074 = pneg %p85
        $region38: #{tpu_custom_call.1} parent=27 // pred_check_branch
          %1076 = sbr.rel (%p1074) target = $region40
        $region39: #{tpu_custom_call.1} parent=27 // pred_region
          %s1078 = ssub.s32 1024, 1024
          %1079 = vsyncadd %s1070, %s1078
          %s1080 = smul.addr %s20, 8
          %s1081 = smul.addr %s1080, 128
          %s1082 = scalar_lea.hbm %s2, %s1081
          %s1083 = sshll.u32 %s1073, 4
          %s1084 = int_to_ptr.vmem [resolvable:$true] %s1083
          %1089 = dma.vmem_to_hbm [thread:$0]  %s1084, 1024, %s1082, %s1070, 128, 128, 8
        $region40: #{tpu_custom_call.1} parent=27 // pred_fallthru
          _
      $region28: #{tpu_custom_call.1} parent=5 // pred_fallthru
        _
      %p1090 = scmp.le.s32.totalorder 2, %s15
      // Predicated region
      $region41: #{tpu_custom_call.1} parent=5 // pred_check
        %p1091 = pneg %p1090
      $region42: #{tpu_custom_call.1} parent=5 // pred_check_branch
        %1093 = sbr.rel (%p1091) target = $region44
      $region43: #{tpu_custom_call.1} parent=5 // pred_region
        %s1094 = ssub.s32 %s15, 2
        // Predicated region
        $region45: #{tpu_custom_call.1} parent=43 // pred_check
          %p1095 = pneg %p91
        $region46: #{tpu_custom_call.1} parent=43 // pred_check_branch
          %1097 = sbr.rel (%p1095) target = $region48
        $region47: #{tpu_custom_call.1} parent=43 // pred_region
          %s1098 = sand.u32 %s76, 1
          %s1099 = scalar_lea.sflag [#allocation4], %s1098
          %s1100 = sand.u32 %s76, 1
          %s1101 = smul.addr %s1100, 64
          %s1102 = scalar_lea.vmem [#allocation7], %s1101
          %1103 = dma.done %s1099, 1024
        $region48: #{tpu_custom_call.1} parent=43 // pred_fallthru
          _
      $region44: #{tpu_custom_call.1} parent=5 // pred_fallthru
        _
    $region6: #{tpu_custom_call.1} parent=1 // loop_footer
      %s19 = sadd.s32 1, %s15
    $region7: #{tpu_custom_call.1} parent=1 // loop_footer_branch
      %14 = sbr.rel target = $region3
    $region8: #{tpu_custom_call.1} parent=1 // loop_exit
      _
    %1104 = vsyncpa [#allocation3], 1
    %s1105 = scalar_lea.sflag [#allocation3], 1
    %1106 = vsyncpa %s1105, 1
    %1107 = vsyncpa [#allocation6], 1
    %1108 = vsyncpa [#allocation4], 1
    %s1109 = scalar_lea.sflag [#allocation4], 1
    %1110 = vsyncpa %s1109, 1

</llo_original>
